<compile_context>
chip_gen: v7x
topology: tpu7x:2x2x1
jax: 0.10.0
libtpu: 0.0.40
codegen_flags: <defaults>
</compile_context>

<pallas_src>
import math

import jax
import jax.numpy as jnp
from jax.experimental import pallas as pl
from jax.experimental.pallas import tpu as pltpu


def _round_up(x, m):
    return ((x + m - 1) // m) * m


def _big_negative(dtype):
    # dtype-aware "effectively -inf" for padded vocab columns: exp underflows to 0,
    # representable in f32/bf16 without overflowing to inf.
    return float(jnp.finfo(dtype).min) / 2


def _vmem_info():
    """(budget_bytes, limit_bytes, min_row_steps) derived from the TPU generation."""
    try:
        cap = int(pltpu.get_tpu_info().vmem_capacity_bytes)
    except Exception:
        cap = 64 << 20  # conservative default: v7x has 64 MiB per TensorCore
    limit = max(min((cap * 3) // 4, 100 << 20), 32 << 20)  # scoped VMEM limit
    budget = min(cap // 2, 64 << 20)                       # planning budget for tiles
    # v7x (<=64 MiB per-TC, 2 TCs/chip): keep >=4 row steps so both cores get work.
    # v5e/v6e (128 MiB, single TC): 2 steps suffice -> bigger row tiles, less W
    # re-streaming from HBM.
    min_row_steps = 4 if cap <= (64 << 20) else 2
    return budget, limit, min_row_steps


def _choose_tile_rows(n_rows, fixed_bytes, per_row_bytes, budget_bytes, min_row_steps):
    """Largest row tile (multiple of 8, <=1024) fitting the budget, or None if even
    8 rows do not fit (caller falls back to the vocab-tiled two-pass plan)."""
    avail = budget_bytes - fixed_bytes
    if avail < 8 * per_row_bytes:
        return None
    tile_r = max(8, (avail // per_row_bytes) // 8 * 8)
    tile_r = min(tile_r, 1024)  # beyond ~1024 rows the ~0.35us/step overhead is <1%
    r8 = _round_up(n_rows, 8)
    tile_r = min(tile_r, r8)
    if r8 >= min_row_steps * 256:
        tile_r = min(tile_r, max(256, _round_up((r8 + min_row_steps - 1) // min_row_steps, 8)))
    return tile_r


def _choose_tile_k(d_model, max_w_block_bytes, v_block, w_itemsize):
    """Largest lane-aligned K tile whose double-buffered W block fits max_w_block_bytes."""
    if d_model % 128 == 0:
        cands, seen = [], set()
        for c in (d_model, 512, 256, 128):
            if c <= d_model and d_model % c == 0 and c not in seen:
                cands.append(c)
                seen.add(c)
    else:
        cands = [d_model]  # full-K block: always legal, adds no K padding
    for c in cands:
        if 2 * c * v_block * w_itemsize <= max_w_block_bytes:
            return c
    return cands[-1]  # smallest; feasibility is decided by the caller


# ----------------------------------------------------------------------------
# Fused single-pass kernels (full padded-vocab-wide blocks)
# ----------------------------------------------------------------------------

def _fused_kernel_out_acc(x_ref, w_ref, b_ref, o_ref):
    """log_softmax(x @ W^T + b) for one (tile_r, V_pad) tile.  The f32 output block
    doubles as the K-axis accumulator: no scratch, no zero-init RMW."""
    k = pl.program_id(1)
    d = jnp.dot(x_ref[...].astype(jnp.bfloat16), w_ref[...].astype(jnp.bfloat16),
                preferred_element_type=jnp.float32)          # single bf16 MXU pass

    @pl.when(k == 0)
    def _():
        o_ref[...] = d

    @pl.when(k > 0)
    def _():
        o_ref[...] += d

    @pl.when(k == pl.num_programs(1) - 1)
    def _():
        logits = o_ref[...] + b_ref[...]                     # bias is f32
        m = jnp.max(logits, axis=-1, keepdims=True)          # XLU reduction
        shifted = logits - m
        lse = jnp.log(jnp.sum(jnp.exp(shifted), axis=-1, keepdims=True))  # EUP + XLU
        o_ref[...] = (shifted - lse).astype(o_ref.dtype)


def _fused_kernel_scratch(x_ref, w_ref, b_ref, o_ref, acc_ref):
    """Same as above but with an explicit f32 accumulator (used when the output
    dtype is narrower than f32, e.g. bf16 log-probs)."""
    k = pl.program_id(1)
    d = jnp.dot(x_ref[...].astype(jnp.bfloat16), w_ref[...].astype(jnp.bfloat16),
                preferred_element_type=jnp.float32)

    @pl.when(k == 0)
    def _():
        acc_ref[...] = d

    @pl.when(k > 0)
    def _():
        acc_ref[...] += d

    @pl.when(k == pl.num_programs(1) - 1)
    def _():
        logits = acc_ref[...] + b_ref[...]
        m = jnp.max(logits, axis=-1, keepdims=True)
        shifted = logits - m
        lse = jnp.log(jnp.sum(jnp.exp(shifted), axis=-1, keepdims=True))
        o_ref[...] = (shifted - lse).astype(o_ref.dtype)


# ----------------------------------------------------------------------------
# Vocab-tiled two-pass kernels (VMEM working set independent of vocab size)
# ----------------------------------------------------------------------------

def _logits_lse_kernel(x_ref, w_ref, b_ref, logits_ref, lse_ref, acc_ref, m_ref, l_ref):
    """Pass 1: per-(row,vocab)-tile logits + online running max / sum-exp per row."""
    j = pl.program_id(1)
    k = pl.program_id(2)
    nj = pl.num_programs(1)
    nk = pl.num_programs(2)

    @pl.when(jnp.logical_and(j == 0, k == 0))
    def _():
        m_ref[...] = jnp.full_like(m_ref, _big_negative(jnp.float32))
        l_ref[...] = jnp.zeros_like(l_ref)

    d = jnp.dot(x_ref[...].astype(jnp.bfloat16), w_ref[...].astype(jnp.bfloat16),
                preferred_element_type=jnp.float32)

    @pl.when(k == 0)
    def _():
        acc_ref[...] = d

    @pl.when(k > 0)
    def _():
        acc_ref[...] += d

    @pl.when(k == nk - 1)
    def _():
        logits = acc_ref[...] + b_ref[...]
        logits_ref[...] = logits
        m_new = jnp.maximum(m_ref[...], jnp.max(logits, axis=-1, keepdims=True))
        l_ref[...] = (l_ref[...] * jnp.exp(m_ref[...] - m_new)
                      + jnp.sum(jnp.exp(logits - m_new), axis=-1, keepdims=True))
        m_ref[...] = m_new

    @pl.when(jnp.logical_and(j == nj - 1, k == nk - 1))
    def _():
        lse_ref[...] = m_ref[...] + jnp.log(l_ref[...])


def _normalize_kernel(logits_ref, lse_ref, o_ref):
    """Pass 2: log-probs = logits - log-sum-exp (pure streaming elementwise)."""
    o_ref[...] = (logits_ref[...] - lse_ref[...]).astype(o_ref.dtype)


# ----------------------------------------------------------------------------
# Wrapper
# ----------------------------------------------------------------------------

def prepare_generator_params(weight, bias):
    """One-time weight prep (do NOT call per forward): W (vocab, d_model), b (vocab,)
    -> lane-dense bf16 W^T (d_model, V_pad) and f32 bias (1, V_pad), vocab padded to
    a multiple of 128 with zero weight columns and a huge-negative bias."""
    V, D = weight.shape
    V_pad = _round_up(V, 128)
    wt = weight.T.astype(jnp.bfloat16)
    b = bias.astype(jnp.float32)
    if V_pad != V:
        wt = jnp.pad(wt, ((0, 0), (0, V_pad - V)))
        b = jnp.pad(b, (0, V_pad - V), constant_values=_big_negative(jnp.float32))
    return wt, b.reshape(1, V_pad)


def generator_log_softmax(x2d, wt_pad, b2d, vocab, *, out_dtype=None,
                          force_two_pass=False):
    """x2d: (R, d_model); wt_pad: (d_model, V_pad) bf16; b2d: (1, V_pad) f32.
    Returns (R, vocab) log-probabilities in `out_dtype` (default: x2d.dtype)."""
    R, D = x2d.shape
    D_w, V_pad = wt_pad.shape
    assert D == D_w, "weight must be prepared as (d_model, V_pad)"
    assert V_pad % 128 == 0 and vocab <= V_pad
    out_dtype = jnp.dtype(out_dtype) if out_dtype is not None else x2d.dtype

    budget, vmem_limit, min_row_steps = _vmem_info()
    x_it = x2d.dtype.itemsize
    w_it = wt_pad.dtype.itemsize
    out_it = out_dtype.itemsize
    fused_acc_in_out = (out_dtype == jnp.float32)

    # ---------------- fused single-pass plan (full V_pad-wide blocks) --------
    tile_k = _choose_tile_k(D, budget // 2, V_pad, w_it)
    fixed = 2 * tile_k * V_pad * w_it + 2 * V_pad * 4          # dbl-buf W + bias
    per_row = 2 * tile_k * x_it + 2 * V_pad * out_it           # dbl-buf x + out
    if not fused_acc_in_out:
        per_row += V_pad * 4                                   # f32 scratch accumulator
    tile_r = None if force_two_pass else _choose_tile_rows(
        R, fixed, per_row, budget, min_row_steps)

    if tile_r is not None:
        n_k = D // tile_k
        R_pad = _round_up(R, tile_r)
        x_p = jnp.pad(x2d, ((0, R_pad - R), (0, 0))) if R_pad != R else x2d
        kernel = _fused_kernel_out_acc if fused_acc_in_out else _fused_kernel_scratch
        scratch = [] if fused_acc_in_out else [pltpu.VMEM((tile_r, V_pad), jnp.float32)]
        out = pl.pallas_call(
            kernel,
            out_shape=jax.ShapeDtypeStruct((R_pad, V_pad), out_dtype),
            grid_spec=pltpu.PrefetchScalarGridSpec(
                num_scalar_prefetch=0,
                grid=(R_pad // tile_r, n_k),
                in_specs=[
                    pl.BlockSpec((tile_r, tile_k), lambda i, k: (i, k)),   # x
                    pl.BlockSpec((tile_k, V_pad), lambda i, k: (k, 0)),    # W^T (bf16)
                    pl.BlockSpec((1, V_pad), lambda i, k: (0, 0)),         # bias (f32)
                ],
                out_specs=pl.BlockSpec((tile_r, V_pad), lambda i, k: (i, 0)),
                scratch_shapes=scratch,
            ),
            compiler_params=pltpu.CompilerParams(
                dimension_semantics=("parallel", "arbitrary"),
                vmem_limit_bytes=vmem_limit,
            ),
        )(x_p, wt_pad, b2d)
        return out[:R, :vocab]

    # ---------------- vocab-tiled two-pass plan (LM-scale vocab / v7x) -------
    # TODO(synk): a fully fused vocab-tiled single pass would have to re-read the
    # log-prob tiles it already wrote; the two-pass form trades one extra logits
    # HBM round trip for a vocab-size-independent VMEM working set.
    tile_n = next(c for c in (1024, 512, 256, 128) if V_pad % c == 0)
    tile_k = _choose_tile_k(D, budget // 4, tile_n, w_it)
    fixed1 = 2 * tile_k * tile_n * w_it + 2 * tile_n * 4
    per_row1 = 2 * tile_k * x_it + 2 * tile_n * 4 + tile_n * 4 + 32  # x, logits, acc, m/l/lse
    tile_r = _choose_tile_rows(R, fixed1, per_row1, budget, min_row_steps)
    if tile_r is None:
        raise ValueError("generator kernel: VMEM budget too small even for the "
                         "vocab-tiled two-pass plan")
    n_k = D // tile_k
    n_j = V_pad // tile_n
    R_pad = _round_up(R, tile_r)
    x_p = jnp.pad(x2d, ((0, R_pad - R), (0, 0))) if R_pad != R else x2d

    logits, lse = pl.pallas_call(
        _logits_lse_kernel,
        out_shape=(jax.ShapeDtypeStruct((R_pad, V_pad), jnp.float32),
                   jax.ShapeDtypeStruct((R_pad, 1), jnp.float32)),
        grid_spec=pltpu.PrefetchScalarGridSpec(
            num_scalar_prefetch=0,
            grid=(R_pad // tile_r, n_j, n_k),
            in_specs=[
                pl.BlockSpec((tile_r, tile_k), lambda i, j, k: (i, k)),   # x
                pl.BlockSpec((tile_k, tile_n), lambda i, j, k: (k, j)),   # W^T (bf16)
                pl.BlockSpec((1, tile_n), lambda i, j, k: (0, j)),        # bias (f32)
            ],
            out_specs=[
                pl.BlockSpec((tile_r, tile_n), lambda i, j, k: (i, j)),   # logits
                pl.BlockSpec((tile_r, 1), lambda i, j, k: (i, 0)),        # lse
            ],
            scratch_shapes=[
                pltpu.VMEM((tile_r, tile_n), jnp.float32),   # logits accumulator
                pltpu.VMEM((tile_r, 1), jnp.float32),        # running max
                pltpu.VMEM((tile_r, 1), jnp.float32),        # running sum-exp
            ],
        ),
        compiler_params=pltpu.CompilerParams(
            dimension_semantics=("parallel", "arbitrary", "arbitrary"),
            vmem_limit_bytes=vmem_limit,
        ),
    )(x_p, wt_pad, b2d)

    out = pl.pallas_call(
        _normalize_kernel,
        out_shape=jax.ShapeDtypeStruct((R_pad, V_pad), out_dtype),
        grid_spec=pltpu.PrefetchScalarGridSpec(
            num_scalar_prefetch=0,
            grid=(R_pad // tile_r, n_j),
            in_specs=[
                pl.BlockSpec((tile_r, tile_n), lambda i, j: (i, j)),
                pl.BlockSpec((tile_r, 1), lambda i, j: (i, 0)),
            ],
            out_specs=pl.BlockSpec((tile_r, tile_n), lambda i, j: (i, j)),
        ),
        compiler_params=pltpu.CompilerParams(
            dimension_semantics=("parallel", "parallel"),
            vmem_limit_bytes=vmem_limit,
        ),
    )(logits, lse)

    return out[:R, :vocab]


class GeneratorPallas:
    """JAX/Pallas port of the PyTorch `Generator`:
    forward(x) = log_softmax(x @ W^T + b, axis=-1)."""

    def __init__(self, d_model, vocab, key):
        kw, kb = jax.random.split(key)
        bound = 1.0 / math.sqrt(d_model)   # nn.Linear default uniform init bound
        self.weight = jax.random.uniform(kw, (vocab, d_model), jnp.float32, -bound, bound)
        self.bias = jax.random.uniform(kb, (vocab,), jnp.float32, -bound, bound)
        self.vocab = vocab
        # Pre-transpose / pad / cast the weight ONCE (not on every forward call).
        self.wt_pad, self.b2d = prepare_generator_params(self.weight, self.bias)

    def __call__(self, x, *, out_dtype=None, force_two_pass=False):
        lead, d = x.shape[:-1], x.shape[-1]
        rows = 1
        for s in lead:
            rows *= s
        y2d = generator_log_softmax(x.reshape(rows, d), self.wt_pad, self.b2d,
                                    self.vocab, out_dtype=out_dtype,
                                    force_two_pass=force_two_pass)
        return y2d.reshape(*lead, self.vocab)


def _reference_generator(x, weight, bias):
    logits = jnp.dot(x, weight.T, precision=jax.lax.Precision.HIGHEST) + bias
    return jax.nn.log_softmax(logits, axis=-1)


if __name__ == "__main__":
    key = jax.random.PRNGKey(0)
    k_x, k_p = jax.random.split(key)

    batch, seq, d_model, vocab = 2, 8, 32, 100  # vocab=100 exercises the 128-pad path

    x = jax.random.normal(k_x, (batch, seq, d_model), dtype=jnp.float32)
    gen = GeneratorPallas(d_model, vocab, k_p)
    ref = _reference_generator(x, gen.weight, gen.bias)

    # Fused single-pass path (f32 output block doubles as the K accumulator).
    out = jax.block_until_ready(gen(x))
    assert out.shape == (batch, seq, vocab)
    assert jnp.allclose(out, ref, atol=5e-2, rtol=0.0)  # bf16-MXU tolerance

    # Vocab-tiled two-pass path (auto-selected for LM-scale vocab / small VMEM).
    out2 = jax.block_until_ready(gen(x, force_two_pass=True))
    assert out2.shape == (batch, seq, vocab)
    assert jnp.allclose(out2, ref, atol=5e-2, rtol=0.0)

    # bf16-output path (explicit f32 scratch-accumulator variant).
    out3 = jax.block_until_ready(gen(x, out_dtype=jnp.bfloat16))
    assert out3.dtype == jnp.bfloat16
    assert jnp.allclose(out3.astype(jnp.float32), ref, atol=1e-1, rtol=0.0)

    print("KERNEL_OK")
</pallas_src>

<mosaic_0001>
module attributes {stable_mosaic.version = 11 : i64} {
  func.func @_fused_kernel_out_acc(%arg0: i32, %arg1: i32, %arg2: memref<16x32xf32, #tpu.memory_space<vmem>>, %arg3: memref<32x128xbf16, #tpu.memory_space<vmem>>, %arg4: memref<1x128xf32, #tpu.memory_space<vmem>>, %arg5: memref<16x128xf32, #tpu.memory_space<vmem>>) attributes {dimension_semantics = [#tpu.dimension_semantics<parallel>, #tpu.dimension_semantics<arbitrary>], iteration_bounds = array<i64: 1, 1>, scalar_prefetch = 0 : i64, scratch_operands = 0 : i64, tpu.core_type = #tpu.core_type<tc>, window_params = [{transform_indices = @transform_0, window_bounds = array<i64: 16, 32>}, {transform_indices = @transform_1, window_bounds = array<i64: 32, 128>}, {pipeline_mode = #tpu.pipeline_mode<synchronous>, transform_indices = @transform_2, window_bounds = array<i64: 1, 128>}, {transform_indices = @transform_3, window_bounds = array<i64: 16, 128>}]} {
    %c0 = arith.constant 0 : index
    %c0_0 = arith.constant 0 : index
    %0 = vector.load %arg2[%c0, %c0_0] : memref<16x32xf32, #tpu.memory_space<vmem>>, vector<16x32xf32>
    %1 = arith.truncf %0 : vector<16x32xf32> to vector<16x32xbf16>
    %c0_1 = arith.constant 0 : index
    %c0_2 = arith.constant 0 : index
    %2 = vector.load %arg3[%c0_1, %c0_2] : memref<32x128xbf16, #tpu.memory_space<vmem>>, vector<32x128xbf16>
    %cst = arith.constant dense<0.000000e+00> : vector<16x128xf32>
    %3 = tpu.matmul %1, %2, %cst {dimension_numbers = #tpu.dot_dimension_numbers<[1], [0], [0], [1], [0, 0, 1, 1], [], []>} : vector<16x32xbf16>, vector<32x128xbf16>, vector<16x128xf32> -> vector<16x128xf32>
    %c0_i32 = arith.constant 0 : i32
    %4 = arith.cmpi eq, %arg1, %c0_i32 : i32
    %5 = arith.extui %4 : i1 to i32
    %c0_i32_3 = arith.constant 0 : i32
    %6 = arith.cmpi ne, %5, %c0_i32_3 : i32
    scf.if %6 {
      %c0_8 = arith.constant 0 : index
      %c0_9 = arith.constant 0 : index
      %13 = vector.load %arg5[%c0_8, %c0_9] : memref<16x128xf32, #tpu.memory_space<vmem>>, vector<16x128xf32>
      tpu.vector_store %arg5[%c0_8, %c0_9], %3 {strides = array<i32>} : memref<16x128xf32, #tpu.memory_space<vmem>>, vector<16x128xf32>,
    } else {
    }
    %c0_i32_4 = arith.constant 0 : i32
    %7 = arith.cmpi sgt, %arg1, %c0_i32_4 : i32
    %8 = arith.extui %7 : i1 to i32
    %c0_i32_5 = arith.constant 0 : i32
    %9 = arith.cmpi ne, %8, %c0_i32_5 : i32
    scf.if %9 {
      %c0_8 = arith.constant 0 : index
      %c0_9 = arith.constant 0 : index
      %13 = vector.load %arg5[%c0_8, %c0_9] : memref<16x128xf32, #tpu.memory_space<vmem>>, vector<16x128xf32>
      %14 = arith.addf %13, %3 : vector<16x128xf32>
      %c0_10 = arith.constant 0 : index
      %c0_11 = arith.constant 0 : index
      %15 = vector.load %arg5[%c0_10, %c0_11] : memref<16x128xf32, #tpu.memory_space<vmem>>, vector<16x128xf32>
      tpu.vector_store %arg5[%c0_10, %c0_11], %14 {strides = array<i32>} : memref<16x128xf32, #tpu.memory_space<vmem>>, vector<16x128xf32>,
    } else {
    }
    %c0_i32_6 = arith.constant 0 : i32
    %10 = arith.cmpi eq, %arg1, %c0_i32_6 : i32
    %11 = arith.extui %10 : i1 to i32
    %c0_i32_7 = arith.constant 0 : i32
    %12 = arith.cmpi ne, %11, %c0_i32_7 : i32
    scf.if %12 {
      %c0_8 = arith.constant 0 : index
      %c0_9 = arith.constant 0 : index
      %13 = vector.load %arg5[%c0_8, %c0_9] : memref<16x128xf32, #tpu.memory_space<vmem>>, vector<16x128xf32>
      %c0_10 = arith.constant 0 : index
      %c0_11 = arith.constant 0 : index
      %14 = vector.load %arg4[%c0_10, %c0_11] : memref<1x128xf32, #tpu.memory_space<vmem>>, vector<1x128xf32>
      %15 = vector.broadcast %14 : vector<1x128xf32> to vector<16x128xf32>
      %16 = arith.addf %13, %15 : vector<16x128xf32>
      %cst_12 = arith.constant dense<0xFF800000> : vector<16xf32>
      %17 = vector.multi_reduction <maximumf>, %16, %cst_12 [1] : vector<16x128xf32> to vector<16xf32>
      %18 = vector.shape_cast %17 : vector<16xf32> to vector<16x1xf32>
      %19 = vector.broadcast %18 : vector<16x1xf32> to vector<16x128xf32>
      %20 = arith.subf %16, %19 : vector<16x128xf32>
      %21 = math.exp %20 : vector<16x128xf32>
      %cst_13 = arith.constant dense<0.000000e+00> : vector<16xf32>
      %22 = vector.multi_reduction <add>, %21, %cst_13 [1] : vector<16x128xf32> to vector<16xf32>
      %23 = vector.shape_cast %22 : vector<16xf32> to vector<16x1xf32>
      %24 = math.log %23 : vector<16x1xf32>
      %25 = vector.broadcast %24 : vector<16x1xf32> to vector<16x128xf32>
      %26 = arith.subf %20, %25 : vector<16x128xf32>
      %c0_14 = arith.constant 0 : index
      %c0_15 = arith.constant 0 : index
      %27 = vector.load %arg5[%c0_14, %c0_15] : memref<16x128xf32, #tpu.memory_space<vmem>>, vector<16x128xf32>
      tpu.vector_store %arg5[%c0_14, %c0_15], %26 {strides = array<i32>} : memref<16x128xf32, #tpu.memory_space<vmem>>, vector<16x128xf32>,
    } else {
    }
    return
  }
  func.func @transform_0(%arg0: i32, %arg1: i32) -> (i32, i32) {
    %c0_i32 = arith.constant 0 : i32
    return %arg0, %arg1 : i32, i32
  }
  func.func @transform_1(%arg0: i32, %arg1: i32) -> (i32, i32) {
    %c0_i32 = arith.constant 0 : i32
    %c0_i32_0 = arith.constant 0 : i32
    return %arg1, %c0_i32 : i32, i32
  }
  func.func @transform_2(%arg0: i32, %arg1: i32) -> (i32, i32) {
    %c0_i32 = arith.constant 0 : i32
    %c0_i32_0 = arith.constant 0 : i32
    %c0_i32_1 = arith.constant 0 : i32
    return %c0_i32, %c0_i32_0 : i32, i32
  }
  func.func @transform_3(%arg0: i32, %arg1: i32) -> (i32, i32) {
    %c0_i32 = arith.constant 0 : i32
    %c0_i32_0 = arith.constant 0 : i32
    return %arg0, %c0_i32 : i32, i32
  }
}

</mosaic_0001>

<llo_original>
// kernel: tpu_custom_call.1
$region0: #{tpu_custom_call.1}
  #allocation0 [shape = 'u32[]', space=smem, size = 0x4, offset = 0x4, fixed_abs, tag = 'smem constant byte address 0x4 - core index']
  #allocation1 [shape = 'u32[144,128]{1,0:T(1,128)}', space=vmem, size = 0x12000, scoped, tag = 'internal scratch']
  %s0 = inlined_call_operand.hbm [shape: f32[16,32], index: 0, kind: input, shape index: {}]
  %s1 = inlined_call_operand.hbm [shape: bf16[32,128], index: 1, kind: input, shape index: {}]
  %s2 = inlined_call_operand.vmem [shape: f32[1,128], index: 2, kind: input, shape index: {}]
  %s3 = inlined_call_operand.hbm [shape: f32[16,128], index: 3, kind: output, shape index: {}]
  %s4 = sld [smem:[#allocation0]]
  $region42: #{tpu_custom_call.1} parent=0
    _
  %s6 = ssub.s32 1, %s4
  %s7 = scalar_select 0, %s6, %s4
  $region1: #{tpu_custom_call.1} parent=0
    #allocation2 [shape = 'u8[8192]{0}', space=vmem, size = 0x2000, scoped, tag = 'input window, operand 0, single buffered']
    #allocation3 [shape = 's32[1]{0}', space=sflag, size = 0x4, scoped, tag = 'scoped memory for tpu_custom_call.1']
    #allocation4 [shape = 's32[1]{0}', space=sflag, size = 0x4, scoped, tag = 'scoped memory for tpu_custom_call.1']
    #allocation5 [shape = 'u8[8192]{0}', space=vmem, size = 0x2000, scoped, tag = 'input window, operand 1, single buffered']
    #allocation6 [shape = 's32[1]{0}', space=sflag, size = 0x4, scoped, tag = 'scoped memory for tpu_custom_call.1']
    #allocation7 [shape = 'u8[8192]{0}', space=vmem, size = 0x2000, scoped, tag = 'output window, operand 0, single buffered']
    %8 = vsyncpa [#allocation3], 0
    %9 = vsyncpa [#allocation6], 0
    %10 = vsyncpa [#allocation4], 0
    // Predicated region
    $region2: #{tpu_custom_call.1} parent=1 // pred_check
      _
    $region3: #{tpu_custom_call.1} parent=1 // pred_check_branch
      %12 = sbr.rel (0) target = $region5
    $region4: #{tpu_custom_call.1} parent=1 // pred_region
      %s14 = ssub.s32 256, 256
      %15 = vsyncadd [#allocation3], %s14
      %s16 = sshll.u32 [#allocation2], 4
      %s17 = int_to_ptr.vmem [resolvable:$true] %s16
      %22 = dma.hbm_to_vmem [thread:$0]  %s0, 256, %s17, [#allocation3], 128, 128, 8
    $region5: #{tpu_custom_call.1} parent=1 // pred_fallthru
      _
    // Predicated region
    $region6: #{tpu_custom_call.1} parent=1 // pred_check
      _
    $region7: #{tpu_custom_call.1} parent=1 // pred_check_branch
      %24 = sbr.rel (0) target = $region9
    $region8: #{tpu_custom_call.1} parent=1 // pred_region
      %s26 = ssub.s32 256, 256
      %27 = vsyncadd [#allocation6], %s26
      %s28 = sshll.u32 [#allocation5], 4
      %s29 = int_to_ptr.vmem [resolvable:$true] %s28
      %34 = dma.hbm_to_vmem [thread:$0]  %s1, 256, %s29, [#allocation6], 64, 64, 4
    $region9: #{tpu_custom_call.1} parent=1 // pred_fallthru
      _
    // Predicated region
    $region10: #{tpu_custom_call.1} parent=1 // pred_check
      _
    $region11: #{tpu_custom_call.1} parent=1 // pred_check_branch
      %36 = sbr.rel (0) target = $region13
    $region12: #{tpu_custom_call.1} parent=1 // pred_region
      _
    $region13: #{tpu_custom_call.1} parent=1 // pred_fallthru
      _
    // Predicated region
    $region14: #{tpu_custom_call.1} parent=1 // pred_check
      _
    $region15: #{tpu_custom_call.1} parent=1 // pred_check_branch
      %38 = sbr.rel (0) target = $region17
    $region16: #{tpu_custom_call.1} parent=1 // pred_region
      %39 = dma.done [#allocation3], 256
    $region17: #{tpu_custom_call.1} parent=1 // pred_fallthru
      _
    // Predicated region
    $region18: #{tpu_custom_call.1} parent=1 // pred_check
      _
    $region19: #{tpu_custom_call.1} parent=1 // pred_check_branch
      %41 = sbr.rel (0) target = $region21
    $region20: #{tpu_custom_call.1} parent=1 // pred_region
      %42 = dma.done [#allocation6], 256
    $region21: #{tpu_custom_call.1} parent=1 // pred_fallthru
      _
    %v44 = vld [vmem:[#allocation2] sm:$0xff]
    %v45 = vld [vmem:[#allocation2 + $0x8] sm:$0xff]
    %v46 = vpack.c.bf16 %v45, %v44
    %v47 = vld [vmem:[#allocation5] sm:$0xf]
    %v48 = vld [vmem:[#allocation5 + $0x4] sm:$0xf]
    %v49 = vld [vmem:[#allocation5 + $0x8] sm:$0xf]
    %v50 = vld [vmem:[#allocation5 + $0xc] sm:$0xf]
    %v55 = vunpack.c.l.b16 %v47
    %v56 = vunpack.c.l.b16 %v48
    %v57 = vunpack.c.l.b16 %v49
    %v58 = vunpack.c.l.b16 %v50
    %v59 = vpack.c.b16 %v56, %v55
    %v60 = vpack.c.b16 %v58, %v57
    %vm63 = vcmask 261120
    %v65 = vsel %vm63, %v46, 0
    %67 = vmatprep.subr.bf16.mxu0 0
    %68 = vmatpush1.bf16.msra.mxu0 %v59
    %69 = vmatprep.subr.bf16.mxu0 0
    %70 = vmatpush1.bf16.msra.mxu0 %v60
    %71 = vmatprep.subr.bf16.mxu0 0
    %72 = vmatpush1.bf16.msra.mxu0 0
    %73 = vmatprep.subr.bf16.mxu0 0
    %74 = vmatpush1.bf16.msra.mxu0 0
    %75 = vmatprep.subr.bf16.mxu0 0
    %76 = vmatpush1.bf16.msra.mxu0 0
    %77 = vmatprep.subr.bf16.mxu0 0
    %78 = vmatpush1.bf16.msra.mxu0 0
    %79 = vmatprep.subr.bf16.mxu0 0
    %80 = vmatpush1.bf16.msra.mxu0 0
    %81 = vmatprep.subr.bf16.mxu0 0
    %82 = vmatpush1.bf16.msra.mxu0 0
    %83 = vmatprep.subr.bf16.mxu0 0
    %84 = vmatpush1.bf16.msra.mxu0 0
    %85 = vmatprep.subr.bf16.mxu0 0
    %86 = vmatpush1.bf16.msra.mxu0 0
    %87 = vmatprep.subr.bf16.mxu0 0
    %88 = vmatpush1.bf16.msra.mxu0 0
    %89 = vmatprep.subr.bf16.mxu0 0
    %90 = vmatpush1.bf16.msra.mxu0 0
    %91 = vmatprep.subr.bf16.mxu0 0
    %92 = vmatpush1.bf16.msra.mxu0 0
    %93 = vmatprep.subr.bf16.mxu0 0
    %94 = vmatpush1.bf16.msra.mxu0 0
    %95 = vmatprep.subr.bf16.mxu0 0
    %96 = vmatpush1.bf16.msra.mxu0 0
    %97 = vmatprep.subr.bf16.mxu0 0
    %98 = vmatpush1.bf16.msra.mxu0 0
    %99 = vmatprep.mubr.bf16.mxu0 0
    %100 = vmatmul.mubr.bf16.gmra.mrb[0].mxu0 %v65
    %v101 = vpop.f32.mrb[0].mxu0
    %v102 = vadd.f32 0.0, %v101
    %v103 = vpop.f32.mrb[0].mxu0
    %v104 = vpop.f32.mrb[0].mxu0
    %v105 = vadd.f32 0.0, %v104
    %v106 = vpop.f32.mrb[0].mxu0
    %107 = vdwg.mxu0
    %p108 = scmp.eq.s32.totalorder 0, 0
    // Predicated region
    $region22: #{tpu_custom_call.1} parent=1 // pred_check
      %p109 = pneg %p108
    $region23: #{tpu_custom_call.1} parent=1 // pred_check_branch
      %111 = sbr.rel (%p109) target = $region25
    $region24: #{tpu_custom_call.1} parent=1 // pred_region
      %112 = vst [vmem:[#allocation7] sm:$0xff] %v102
      %113 = vst [vmem:[#allocation7 + $0x8] sm:$0xff] %v105
    $region25: #{tpu_custom_call.1} parent=1 // pred_fallthru
      _
    %p114 = scmp.gt.s32.totalorder 0, 0
    // Predicated region
    $region26: #{tpu_custom_call.1} parent=1 // pred_check
      %p115 = pneg %p114
    $region27: #{tpu_custom_call.1} parent=1 // pred_check_branch
      %117 = sbr.rel (%p115) target = $region29
    $region28: #{tpu_custom_call.1} parent=1 // pred_region
      %v118 = vld [vmem:[#allocation7] sm:$0xff]
      %v119 = vld [vmem:[#allocation7 + $0x8] sm:$0xff]
      %v120 = vadd.f32 %v118, %v102
      %v121 = vadd.f32 %v119, %v105
      %122 = vst [vmem:[#allocation7] sm:$0xff] %v120
      %123 = vst [vmem:[#allocation7 + $0x8] sm:$0xff] %v121
    $region29: #{tpu_custom_call.1} parent=1 // pred_fallthru
      _
    // Predicated region
    $region30: #{tpu_custom_call.1} parent=1 // pred_check
      %p124 = pneg %p108
    $region31: #{tpu_custom_call.1} parent=1 // pred_check_branch
      %126 = sbr.rel (%p124) target = $region33
    $region32: #{tpu_custom_call.1} parent=1 // pred_region
      %v127 = vld [vmem:[#allocation7] sm:$0xff]
      %v128 = vld [vmem:[#allocation7 + $0x8] sm:$0xff]
      %v129 = vld [vmem:[%s2] sm:$0x1]
      %v131 = vlaneseq
      %v132 = vshrl.u32 %v131, 7
      %v133 = vsub.s32 0, %v132
      %v134 = vrot.slane %v129, %v133
      %v136 = vadd.f32 %v127, %v134
      %v137 = vadd.f32 %v128, %v134
      %138 = vmax.xlane.f32.xlu0 %v136
      %v139 = vpop.xlane.xlu0 %138
      %140 = vmax.xlane.f32.xlu0 %v137
      %v141 = vpop.xlane.xlu0 %140
      %v142 = vsub.f32 %v136, %v139
      %v143 = vsub.f32 %v137, %v141
      %v144 = vmul.f32 %v142, 1.442695
      %v145 = vpow.pop %v144
      %v146 = vmul.f32 %v143, 1.442695
      %v147 = vpow.pop %v146
      %148 = vadd.xlane.f32.xlu0 %v145
      %v149 = vpop.xlane.xlu0 %148
      %150 = vadd.xlane.f32.xlu0 %v147
      %v151 = vpop.xlane.xlu0 %150
      %v152 = vlog2.pop %v149
      %v153 = vmul.f32 %v152, 0.6931472
      %v154 = vlog2.pop %v151
      %v155 = vmul.f32 %v154, 0.6931472
      %v156 = vsub.f32 %v142, %v153
      %v157 = vsub.f32 %v143, %v155
      %158 = vst [vmem:[#allocation7] sm:$0xff] %v156
      %159 = vst [vmem:[#allocation7 + $0x8] sm:$0xff] %v157
    $region33: #{tpu_custom_call.1} parent=1 // pred_fallthru
      _
    // Predicated region
    $region34: #{tpu_custom_call.1} parent=1 // pred_check
      _
    $region35: #{tpu_custom_call.1} parent=1 // pred_check_branch
      %161 = sbr.rel (0) target = $region37
    $region36: #{tpu_custom_call.1} parent=1 // pred_region
      %s163 = ssub.s32 256, 256
      %164 = vsyncadd [#allocation4], %s163
      %s165 = sshll.u32 [#allocation7], 4
      %s166 = int_to_ptr.vmem [resolvable:$true] %s165
      %171 = dma.vmem_to_hbm [thread:$0]  %s166, 256, %s3, [#allocation4], 128, 128, 8
    $region37: #{tpu_custom_call.1} parent=1 // pred_fallthru
      _
    // Predicated region
    $region38: #{tpu_custom_call.1} parent=1 // pred_check
      _
    $region39: #{tpu_custom_call.1} parent=1 // pred_check_branch
      %173 = sbr.rel (0) target = $region41
    $region40: #{tpu_custom_call.1} parent=1 // pred_region
      %174 = dma.done [#allocation4], 256
    $region41: #{tpu_custom_call.1} parent=1 // pred_fallthru
      _
    %175 = vsyncpa [#allocation3], 1
    %176 = vsyncpa [#allocation6], 1
    %177 = vsyncpa [#allocation4], 1

</llo_original>
